<compile_context>
chip_gen: v7x
topology: tpu7x:2x2x1
jax: 0.10.0
libtpu: 0.0.40
codegen_flags: <defaults>
</compile_context>

<pallas_src>
import numpy as np
import jax
import jax.numpy as jnp
from jax import lax
from jax.experimental import pallas as pl
from jax.experimental.pallas import tpu as pltpu


# ---------------------------------------------------------------------------
# Pallas kernel:  o = relu( relu(P @ W1 + b1) @ W2 + b2 )   (tiled)
# ---------------------------------------------------------------------------
def convmlp_kernel(p_ref, w1_ref, b1_ref, w2_ref, b2_ref, o_ref, h_ref):
    # fc1 result for this M tile is shared by all Cout tiles (inner grid axis):
    # compute it once at j == 0 and keep it resident in a bf16 VMEM scratch.
    @pl.when(pl.program_id(1) == 0)
    def _():
        h = jnp.dot(p_ref[...], w1_ref[...], preferred_element_type=jnp.float32)
        h = jnp.maximum(h + b1_ref[...], 0.0)          # bias + ReLU (act1)
        # dropout (eval mode) = identity
        # TODO(synk): training-mode dropout via pltpu.prng_* not implemented.
        h_ref[...] = h.astype(h_ref.dtype)

    # fc2 (1x1 conv as matmul) + bias + ReLU (act2), one Cout tile per step.
    y = jnp.dot(h_ref[...], w2_ref[...], preferred_element_type=jnp.float32)
    y = y + b2_ref[...]
    o_ref[...] = jnp.maximum(y, 0.0).astype(o_ref.dtype)


# ---------------------------------------------------------------------------
# Glue: adaptive_avg_pool2d (only taken when spatial < kernel_size),
#       im2col patch extraction, padding helpers.
# ---------------------------------------------------------------------------
def adaptive_avg_pool2d(x, out_hw):
    """NCHW adaptive average pool matching F.adaptive_avg_pool2d."""
    N, C, H, W = x.shape
    OH, OW = out_hw
    rows = []
    for i in range(OH):
        hs, he = int(np.floor(i * H / OH)), int(np.ceil((i + 1) * H / OH))
        cols = []
        for j in range(OW):
            ws, we = int(np.floor(j * W / OW)), int(np.ceil((j + 1) * W / OW))
            cols.append(jnp.mean(x[:, :, hs:he, ws:we], axis=(2, 3)))
        rows.append(jnp.stack(cols, axis=-1))          # (N, C, OW)
    return jnp.stack(rows, axis=2)                     # (N, C, OH, OW)


def im2col(x, k):
    """x: (N, C, H, W) -> patches (N*Ho*Wo, C*k*k); tap order (C, ki, kj)
    matches PyTorch conv weight.reshape(Cout, Cin*k*k)."""
    N, C, H, W = x.shape
    Ho, Wo = H - k + 1, W - k + 1
    taps = []
    for i in range(k):
        for j in range(k):
            taps.append(x[:, :, i:i + Ho, j:j + Wo])    # (N, C, Ho, Wo)
    p = jnp.stack(taps, axis=2)                         # (N, C, k*k, Ho, Wo)
    p = p.reshape(N, C * k * k, Ho, Wo)
    p = p.transpose(0, 2, 3, 1).reshape(N * Ho * Wo, C * k * k)
    return p, Ho, Wo


def _round_up(x, m):
    return ((x + m - 1) // m) * m


def conv_mlp_forward(x, params, kernel_size, *, tm=256, tn=128):
    """Full ConvMlp forward (eval mode).  x: NCHW float32 -> NCHW float32."""
    w1, b1, w2, b2 = params  # w1: (Cmid, Cin, k, k), w2: (Cout, Cmid, 1, 1)

    # adaptive avg pool branch (static shapes -> python-level branch)
    if x.shape[-2] < kernel_size or x.shape[-1] < kernel_size:
        out_size = (max(kernel_size, x.shape[-2]), max(kernel_size, x.shape[-1]))
        x = adaptive_avg_pool2d(x, out_size)

    N = x.shape[0]
    cmid = w1.shape[0]
    cout = w2.shape[0]

    # TODO(synk): build the k*k taps in-kernel from an NHWC spatial tile to
    # avoid the k^2 im2col HBM blow-up at production sizes (k=7 VGG head).
    patches, Ho, Wo = im2col(x, kernel_size)            # (M, Cin*k*k)
    M, K = patches.shape

    # Pad everything to MXU / lane-friendly sizes (multiples of 128 on the
    # contraction & channel dims, multiple of the tile on M).  Zero padding
    # keeps the math exact; padded rows/cols are sliced away afterwards.
    k_pad = _round_up(K, 128)
    cmid_pad = _round_up(cmid, 128)
    cout_pad = _round_up(cout, 128)
    tn = min(tn, cout_pad)
    m_pad = _round_up(M, tm)

    patches_p = jnp.pad(patches, ((0, m_pad - M), (0, k_pad - K))).astype(jnp.bfloat16)
    w1_mat = jnp.pad(w1.reshape(cmid, -1).T,
                     ((0, k_pad - K), (0, cmid_pad - cmid))).astype(jnp.bfloat16)
    w2_mat = jnp.pad(w2.reshape(cout, cmid).T,
                     ((0, cmid_pad - cmid), (0, cout_pad - cout))).astype(jnp.bfloat16)
    b1_row = jnp.pad(b1, (0, cmid_pad - cmid)).reshape(1, cmid_pad).astype(jnp.float32)
    b2_row = jnp.pad(b2, (0, cout_pad - cout)).reshape(1, cout_pad).astype(jnp.float32)

    grid = (m_pad // tm, cout_pad // tn)

    # VMEM estimate (double-buffered tiles + h scratch) -> explicit limit,
    # kept well under the 32 MiB scoped / 64 MiB physical budget on v7x.
    vmem_est = (2 * tm * k_pad * 2          # patches tile (bf16)
                + 2 * k_pad * cmid_pad * 2  # w1 (bf16, resident)
                + 2 * cmid_pad * 4          # b1
                + 2 * cmid_pad * tn * 2     # w2 tile (bf16)
                + 2 * tn * 4                # b2 tile
                + 2 * tm * tn * 4           # out tile (f32)
                + tm * cmid_pad * 2)        # h scratch (bf16)
    vmem_limit = int(min(64 * 2 ** 20, max(16 * 2 ** 20, 4 * vmem_est)))

    cost = pl.CostEstimate(
        flops=2 * M * K * cmid + 2 * M * cmid * cout,
        transcendentals=0,
        bytes_accessed=(patches_p.size * 2 + w1_mat.size * 2 + w2_mat.size * 2
                        + b1_row.size * 4 + b2_row.size * 4
                        + m_pad * cout_pad * 4),
    )

    # TODO(synk): for production Cin*k^2 (~25k) add a K grid axis with a f32
    # VMEM accumulator (pl.when init/finalize) instead of a resident w1.
    out_flat = pl.pallas_call(
        convmlp_kernel,
        out_shape=jax.ShapeDtypeStruct((m_pad, cout_pad), jnp.float32),
        grid_spec=pltpu.PrefetchScalarGridSpec(
            num_scalar_prefetch=0,
            grid=grid,
            in_specs=[
                pl.BlockSpec((tm, k_pad), lambda i, j: (i, 0)),        # patches
                pl.BlockSpec((k_pad, cmid_pad), lambda i, j: (0, 0)),  # w1
                pl.BlockSpec((1, cmid_pad), lambda i, j: (0, 0)),      # b1
                pl.BlockSpec((cmid_pad, tn), lambda i, j: (0, j)),     # w2
                pl.BlockSpec((1, tn), lambda i, j: (0, j)),            # b2
            ],
            out_specs=pl.BlockSpec((tm, tn), lambda i, j: (i, j)),
            scratch_shapes=[pltpu.VMEM((tm, cmid_pad), jnp.bfloat16)],
        ),
        compiler_params=pltpu.CompilerParams(
            dimension_semantics=("parallel", "arbitrary"),
            vmem_limit_bytes=vmem_limit,
        ),
        cost_estimate=cost,
    )(patches_p, w1_mat, b1_row, w2_mat, b2_row)

    out = out_flat[:M, :cout]                           # drop padding
    # Module contract is NCHW; a consumer happy with NHWC could skip this
    # transpose (saves a full HBM round trip).
    return out.reshape(N, Ho, Wo, cout).transpose(0, 3, 1, 2)


# ---------------------------------------------------------------------------
# Pure-JAX reference (real f32 convs) for a sanity check.
# ---------------------------------------------------------------------------
def conv_mlp_reference(x, params, kernel_size):
    w1, b1, w2, b2 = params
    if x.shape[-2] < kernel_size or x.shape[-1] < kernel_size:
        out_size = (max(kernel_size, x.shape[-2]), max(kernel_size, x.shape[-1]))
        x = adaptive_avg_pool2d(x, out_size)
    dn = lax.conv_dimension_numbers(x.shape, w1.shape, ("NCHW", "OIHW", "NCHW"))
    h = lax.conv_general_dilated(x, w1, (1, 1), "VALID", dimension_numbers=dn)
    h = jnp.maximum(h + b1[None, :, None, None], 0.0)
    dn2 = lax.conv_dimension_numbers(h.shape, w2.shape, ("NCHW", "OIHW", "NCHW"))
    y = lax.conv_general_dilated(h, w2, (1, 1), "VALID", dimension_numbers=dn2)
    return jnp.maximum(y + b2[None, :, None, None], 0.0)


if __name__ == "__main__":
    # Small config consistent with ConvMlp(in_features, out_features, kernel_size)
    in_features = 8
    out_features = 32
    kernel_size = 3
    mlp_ratio = 1.0
    mid_features = int(out_features * mlp_ratio)

    key = jax.random.PRNGKey(0)
    k_x, k_w1, k_b1, k_w2, k_b2 = jax.random.split(key, 5)

    x = jax.random.normal(k_x, (2, in_features, 16, 16), dtype=jnp.float32)

    # Deterministic parameter init (shapes from nn.Conv2d in __init__)
    w1 = jax.random.normal(k_w1, (mid_features, in_features, kernel_size, kernel_size),
                           dtype=jnp.float32) * 0.05
    b1 = jax.random.normal(k_b1, (mid_features,), dtype=jnp.float32) * 0.05
    w2 = jax.random.normal(k_w2, (out_features, mid_features, 1, 1),
                           dtype=jnp.float32) * 0.05
    b2 = jax.random.normal(k_b2, (out_features,), dtype=jnp.float32) * 0.05
    params = (w1, b1, w2, b2)

    out = conv_mlp_forward(x, params, kernel_size)
    out = jax.block_until_ready(out)

    ref = jax.block_until_ready(conv_mlp_reference(x, params, kernel_size))
    assert out.shape == ref.shape == (2, out_features, 14, 14)
    # bf16 MXU inputs with f32 accumulation -> loosen tolerance vs f32 reference.
    np.testing.assert_allclose(np.asarray(out), np.asarray(ref), rtol=2e-2, atol=1e-2)

    print("KERNEL_OK")
</pallas_src>

<mosaic_0001>
module attributes {stable_mosaic.version = 11 : i64} {
  func.func @convmlp_kernel(%arg0: i32, %arg1: i32, %arg2: memref<256x128xbf16, #tpu.memory_space<vmem>>, %arg3: memref<128x128xbf16, #tpu.memory_space<vmem>>, %arg4: memref<1x128xf32, #tpu.memory_space<vmem>>, %arg5: memref<128x128xbf16, #tpu.memory_space<vmem>>, %arg6: memref<1x128xf32, #tpu.memory_space<vmem>>, %arg7: memref<256x128xf32, #tpu.memory_space<vmem>>, %arg8: memref<256x128xbf16, #tpu.memory_space<vmem>>) attributes {dimension_semantics = [#tpu.dimension_semantics<parallel>, #tpu.dimension_semantics<arbitrary>], iteration_bounds = array<i64: 2, 1>, scalar_prefetch = 0 : i64, scratch_operands = 1 : i64, tpu.core_type = #tpu.core_type<tc>, window_params = [{transform_indices = @transform_0, window_bounds = array<i64: 256, 128>}, {pipeline_mode = #tpu.pipeline_mode<synchronous>, transform_indices = @transform_1, window_bounds = array<i64: 128, 128>}, {pipeline_mode = #tpu.pipeline_mode<synchronous>, transform_indices = @transform_2, window_bounds = array<i64: 1, 128>}, {transform_indices = @transform_3, window_bounds = array<i64: 128, 128>}, {transform_indices = @transform_4, window_bounds = array<i64: 1, 128>}, {transform_indices = @transform_5, window_bounds = array<i64: 256, 128>}]} {
    %c0_i32 = arith.constant 0 : i32
    %0 = arith.cmpi eq, %arg1, %c0_i32 : i32
    %1 = arith.extui %0 : i1 to i32
    %c0_i32_0 = arith.constant 0 : i32
    %2 = arith.cmpi ne, %1, %c0_i32_0 : i32
    scf.if %2 {
      %c0_9 = arith.constant 0 : index
      %c0_10 = arith.constant 0 : index
      %12 = vector.load %arg2[%c0_9, %c0_10] : memref<256x128xbf16, #tpu.memory_space<vmem>>, vector<256x128xbf16>
      %c0_11 = arith.constant 0 : index
      %c0_12 = arith.constant 0 : index
      %13 = vector.load %arg3[%c0_11, %c0_12] : memref<128x128xbf16, #tpu.memory_space<vmem>>, vector<128x128xbf16>
      %cst_13 = arith.constant dense<0.000000e+00> : vector<256x128xf32>
      %14 = tpu.matmul %12, %13, %cst_13 {dimension_numbers = #tpu.dot_dimension_numbers<[1], [0], [0], [1], [0, 0, 1, 1], [], []>} : vector<256x128xbf16>, vector<128x128xbf16>, vector<256x128xf32> -> vector<256x128xf32>
      %c0_14 = arith.constant 0 : index
      %c0_15 = arith.constant 0 : index
      %15 = vector.load %arg4[%c0_14, %c0_15] : memref<1x128xf32, #tpu.memory_space<vmem>>, vector<1x128xf32>
      %16 = vector.broadcast %15 : vector<1x128xf32> to vector<256x128xf32>
      %17 = arith.addf %14, %16 : vector<256x128xf32>
      %cst_16 = arith.constant 0.000000e+00 : f32
      %18 = vector.broadcast %cst_16 : f32 to vector<256x128xf32>
      %19 = arith.maximumf %17, %18 : vector<256x128xf32>
      %20 = arith.truncf %19 : vector<256x128xf32> to vector<256x128xbf16>
      %c0_17 = arith.constant 0 : index
      %c0_18 = arith.constant 0 : index
      %21 = vector.load %arg8[%c0_17, %c0_18] : memref<256x128xbf16, #tpu.memory_space<vmem>>, vector<256x128xbf16>
      tpu.vector_store %arg8[%c0_17, %c0_18], %20 {strides = array<i32>} : memref<256x128xbf16, #tpu.memory_space<vmem>>, vector<256x128xbf16>,
    } else {
    }
    %c0 = arith.constant 0 : index
    %c0_1 = arith.constant 0 : index
    %3 = vector.load %arg8[%c0, %c0_1] : memref<256x128xbf16, #tpu.memory_space<vmem>>, vector<256x128xbf16>
    %c0_2 = arith.constant 0 : index
    %c0_3 = arith.constant 0 : index
    %4 = vector.load %arg5[%c0_2, %c0_3] : memref<128x128xbf16, #tpu.memory_space<vmem>>, vector<128x128xbf16>
    %cst = arith.constant dense<0.000000e+00> : vector<256x128xf32>
    %5 = tpu.matmul %3, %4, %cst {dimension_numbers = #tpu.dot_dimension_numbers<[1], [0], [0], [1], [0, 0, 1, 1], [], []>} : vector<256x128xbf16>, vector<128x128xbf16>, vector<256x128xf32> -> vector<256x128xf32>
    %c0_4 = arith.constant 0 : index
    %c0_5 = arith.constant 0 : index
    %6 = vector.load %arg6[%c0_4, %c0_5] : memref<1x128xf32, #tpu.memory_space<vmem>>, vector<1x128xf32>
    %7 = vector.broadcast %6 : vector<1x128xf32> to vector<256x128xf32>
    %8 = arith.addf %5, %7 : vector<256x128xf32>
    %cst_6 = arith.constant 0.000000e+00 : f32
    %9 = vector.broadcast %cst_6 : f32 to vector<256x128xf32>
    %10 = arith.maximumf %8, %9 : vector<256x128xf32>
    %c0_7 = arith.constant 0 : index
    %c0_8 = arith.constant 0 : index
    %11 = vector.load %arg7[%c0_7, %c0_8] : memref<256x128xf32, #tpu.memory_space<vmem>>, vector<256x128xf32>
    tpu.vector_store %arg7[%c0_7, %c0_8], %10 {strides = array<i32>} : memref<256x128xf32, #tpu.memory_space<vmem>>, vector<256x128xf32>,
    return
  }
  func.func @transform_0(%arg0: i32, %arg1: i32) -> (i32, i32) {
    %c0_i32 = arith.constant 0 : i32
    %c0_i32_0 = arith.constant 0 : i32
    return %arg0, %c0_i32 : i32, i32
  }
  func.func @transform_1(%arg0: i32, %arg1: i32) -> (i32, i32) {
    %c0_i32 = arith.constant 0 : i32
    %c0_i32_0 = arith.constant 0 : i32
    %c0_i32_1 = arith.constant 0 : i32
    return %c0_i32, %c0_i32_0 : i32, i32
  }
  func.func @transform_2(%arg0: i32, %arg1: i32) -> (i32, i32) {
    %c0_i32 = arith.constant 0 : i32
    %c0_i32_0 = arith.constant 0 : i32
    %c0_i32_1 = arith.constant 0 : i32
    return %c0_i32, %c0_i32_0 : i32, i32
  }
  func.func @transform_3(%arg0: i32, %arg1: i32) -> (i32, i32) {
    %c0_i32 = arith.constant 0 : i32
    %c0_i32_0 = arith.constant 0 : i32
    return %c0_i32, %arg1 : i32, i32
  }
  func.func @transform_4(%arg0: i32, %arg1: i32) -> (i32, i32) {
    %c0_i32 = arith.constant 0 : i32
    %c0_i32_0 = arith.constant 0 : i32
    return %c0_i32, %arg1 : i32, i32
  }
  func.func @transform_5(%arg0: i32, %arg1: i32) -> (i32, i32) {
    %c0_i32 = arith.constant 0 : i32
    return %arg0, %arg1 : i32, i32
  }
}

</mosaic_0001>

<llo_original>
// kernel: tpu_custom_call.1
$region0: #{tpu_custom_call.1}
  #allocation0 [shape = 'u32[]', space=smem, size = 0x4, offset = 0x4, fixed_abs, tag = 'smem constant byte address 0x4 - core index']
  #allocation1 [shape = 'u32[144,128]{1,0:T(1,128)}', space=vmem, size = 0x12000, scoped, tag = 'internal scratch']
  #allocation2 [shape = 'bf16[256,128]{1,0:T(16,128)(2,1)}', space=vmem, size = 0x10000, scoped, tag = 'scratch operand']
  %s0 = inlined_call_operand.hbm [shape: bf16[512,128], index: 0, kind: input, shape index: {}]
  %s1 = inlined_call_operand.hbm [shape: bf16[128,128], index: 1, kind: input, shape index: {}]
  %s2 = inlined_call_operand.vmem [shape: f32[1,128], index: 2, kind: input, shape index: {}]
  %s3 = inlined_call_operand.hbm [shape: bf16[128,128], index: 3, kind: input, shape index: {}]
  %s4 = inlined_call_operand.vmem [shape: f32[1,128], index: 4, kind: input, shape index: {}]
  %s5 = inlined_call_operand.hbm [shape: f32[512,128], index: 5, kind: output, shape index: {}]
  %s6 = sld [smem:[#allocation0]]
  $region69: #{tpu_custom_call.1} parent=0
    _
  %s8 = ssub.s32 1, %s6
  %s9 = scalar_select 0, %s8, %s6
  $region1: #{tpu_custom_call.1} parent=0
    #allocation3 [shape = 'u8[131072]{0}', space=vmem, size = 0x20000, scoped, tag = 'input window, operand 0']
    #allocation4 [shape = 's32[2]{0}', space=sflag, size = 0x8, scoped, tag = 'scoped memory for tpu_custom_call.1']
    #allocation5 [shape = 's32[2]{0}', space=sflag, size = 0x8, scoped, tag = 'scoped memory for tpu_custom_call.1']
    #allocation6 [shape = 'u8[32768]{0}', space=vmem, size = 0x8000, scoped, tag = 'input window, operand 1, single buffered']
    #allocation7 [shape = 's32[1]{0}', space=sflag, size = 0x4, scoped, tag = 'scoped memory for tpu_custom_call.1']
    #allocation8 [shape = 'u8[32768]{0}', space=vmem, size = 0x8000, scoped, tag = 'input window, operand 3, single buffered']
    #allocation9 [shape = 'u8[262144]{0}', space=vmem, size = 0x40000, scoped, tag = 'output window, operand 0']
    %10 = vsyncpa [#allocation4], 0
    %s11 = scalar_lea.sflag [#allocation4], 1
    %12 = vsyncpa %s11, 0
    %13 = vsyncpa [#allocation7], 0
    %14 = vsyncpa [#allocation5], 0
    %s15 = scalar_lea.sflag [#allocation5], 1
    %16 = vsyncpa %s15, 0
    loop: start=0, step=1, limit=4
    $region2: #{tpu_custom_call.1} parent=1 // loop_pre_header
      _
    $region3: #{tpu_custom_call.1} parent=1 // loop_header
      %s18 = sphi 0, %s22
      %p19 = scmp.ge.s32.totalorder %s18, 4
      %s25 = sphi 0, %s37
      %s26 = sphi 0, %s33
      %s27 = sphi 0, %s25
      %s28 = sphi 0, %s26
      %s29 = sphi 0, %s27
      %s30 = sphi 0, %s28
      %s40 = sphi 0, %s42
      %s43 = sphi 0, %s40
      %s44 = sphi 0, %s43
      %s60 = sphi 0, %s44
      %s64 = sphi 0, %s64
      %s66 = sphi 0, %s64
      %s67 = sphi 0, %s66
      %s81 = sphi 0, %s67
      %s85 = sphi 0, %s85
      %s87 = sphi 0, %s85
      %s88 = sphi 0, %s87
      %s102 = sphi 0, %s88
      %s108 = sphi 0, %s110
      %s111 = sphi 0, %s108
      %s112 = sphi 0, %s111
      %s128 = sphi 0, %s112
      %s134 = sphi 0, %s136
      %s137 = sphi 0, %s134
      %s138 = sphi 0, %s137
      %s154 = sphi 0, %s138
      %s162 = sphi 0, %s164
      %s165 = sphi 0, %s162
      %s166 = sphi 0, %s165
      %s182 = sphi 0, %s166
    $region4: #{tpu_custom_call.1} parent=1 // loop_header_branch
      %21 = sbr.rel (%p19) target = $region8
    $region5: #{tpu_custom_call.1} parent=1 // loop_body
      %s23 = ssub.s32 %s18, 1
      %s24 = ssub.s32 %s18, 2
      %s31 = sadd.s32 1, %s26
      %p32 = scmp.ge.s32.totalorder %s31, 1
      %s33 = scalar_select %p32, 0, %s31
      %s34 = sadd.s32 1, %s25
      %s35 = scalar_select %p32, %s34, %s25
      %p36 = scmp.ge.s32.totalorder %s35, 2
      %s37 = scalar_select %p36, 0, %s35
      %s38 = ssub.s32 %s25, %s37
      %p39 = scmp.eq.s32.totalorder %s38, 0
      %s41 = sadd.s32 %s40, 1
      %s42 = scalar_select %p39, %s40, %s41
      %p45 = pneg %p39
      %p46 = scmp.eq.s32.totalorder %s18, 1
      %p47 = por %p45, %p46
      %p48 = scmp.ne.s32.totalorder %s40, %s43
      %p49 = scmp.eq.s32.totalorder %s18, 0
      %p50 = por %p48, %p49
      %p51 = scmp.ne.s32.totalorder %s40, %s43
      %p52 = scmp.eq.s32.totalorder %s23, 1
      %p53 = por %p51, %p52
      %p54 = scmp.ne.s32.totalorder %s43, %s44
      %p55 = scmp.eq.s32.totalorder %s23, 0
      %p56 = por %p54, %p55
      %p57 = scmp.ne.s32.totalorder %s43, %s44
      %p58 = scmp.eq.s32.totalorder %s24, 1
      %p59 = por %p57, %p58
      %p61 = scmp.ne.s32.totalorder %s44, %s60
      %p62 = scmp.eq.s32.totalorder %s24, 0
      %p63 = por %p61, %p62
      %s65 = sadd.s32 %s64, 1
      %p68 = scmp.eq.s32.totalorder %s18, 1
      %p69 = scmp.ne.s32.totalorder %s64, %s66
      %p70 = scmp.eq.s32.totalorder %s18, 0
      %p71 = por %p69, %p70
      %p72 = scmp.ne.s32.totalorder %s64, %s66
      %p73 = scmp.eq.s32.totalorder %s23, 1
      %p74 = por %p72, %p73
      %p75 = scmp.ne.s32.totalorder %s66, %s67
      %p76 = scmp.eq.s32.totalorder %s23, 0
      %p77 = por %p75, %p76
      %p78 = scmp.ne.s32.totalorder %s66, %s67
      %p79 = scmp.eq.s32.totalorder %s24, 1
      %p80 = por %p78, %p79
      %p82 = scmp.ne.s32.totalorder %s67, %s81
      %p83 = scmp.eq.s32.totalorder %s24, 0
      %p84 = por %p82, %p83
      %s86 = sadd.s32 %s85, 1
      %p89 = scmp.eq.s32.totalorder %s18, 1
      %p90 = scmp.ne.s32.totalorder %s85, %s87
      %p91 = scmp.eq.s32.totalorder %s18, 0
      %p92 = por %p90, %p91
      %p93 = scmp.ne.s32.totalorder %s85, %s87
      %p94 = scmp.eq.s32.totalorder %s23, 1
      %p95 = por %p93, %p94
      %p96 = scmp.ne.s32.totalorder %s87, %s88
      %p97 = scmp.eq.s32.totalorder %s23, 0
      %p98 = por %p96, %p97
      %p99 = scmp.ne.s32.totalorder %s87, %s88
      %p100 = scmp.eq.s32.totalorder %s24, 1
      %p101 = por %p99, %p100
      %p103 = scmp.ne.s32.totalorder %s88, %s102
      %p104 = scmp.eq.s32.totalorder %s24, 0
      %p105 = por %p103, %p104
      %s106 = ssub.s32 %s26, %s33
      %p107 = scmp.eq.s32.totalorder %s106, 0
      %s109 = sadd.s32 %s108, 1
      %s110 = scalar_select %p107, %s108, %s109
      %p113 = pneg %p107
      %p114 = scmp.eq.s32.totalorder %s18, 1
      %p115 = por %p113, %p114
      %p116 = scmp.ne.s32.totalorder %s108, %s111
      %p117 = scmp.eq.s32.totalorder %s18, 0
      %p118 = por %p116, %p117
      %p119 = scmp.ne.s32.totalorder %s108, %s111
      %p120 = scmp.eq.s32.totalorder %s23, 1
      %p121 = por %p119, %p120
      %p122 = scmp.ne.s32.totalorder %s111, %s112
      %p123 = scmp.eq.s32.totalorder %s23, 0
      %p124 = por %p122, %p123
      %p125 = scmp.ne.s32.totalorder %s111, %s112
      %p126 = scmp.eq.s32.totalorder %s24, 1
      %p127 = por %p125, %p126
      %p129 = scmp.ne.s32.totalorder %s112, %s128
      %p130 = scmp.eq.s32.totalorder %s24, 0
      %p131 = por %p129, %p130
      %s132 = ssub.s32 %s26, %s33
      %p133 = scmp.eq.s32.totalorder %s132, 0
      %s135 = sadd.s32 %s134, 1
      %s136 = scalar_select %p133, %s134, %s135
      %p139 = pneg %p133
      %p140 = scmp.eq.s32.totalorder %s18, 1
      %p141 = por %p139, %p140
      %p142 = scmp.ne.s32.totalorder %s134, %s137
      %p143 = scmp.eq.s32.totalorder %s18, 0
      %p144 = por %p142, %p143
      %p145 = scmp.ne.s32.totalorder %s134, %s137
      %p146 = scmp.eq.s32.totalorder %s23, 1
      %p147 = por %p145, %p146
      %p148 = scmp.ne.s32.totalorder %s137, %s138
      %p149 = scmp.eq.s32.totalorder %s23, 0
      %p150 = por %p148, %p149
      %p151 = scmp.ne.s32.totalorder %s137, %s138
      %p152 = scmp.eq.s32.totalorder %s24, 1
      %p153 = por %p151, %p152
      %p155 = scmp.ne.s32.totalorder %s138, %s154
      %p156 = scmp.eq.s32.totalorder %s24, 0
      %p157 = por %p155, %p156
      %s158 = ssub.s32 %s25, %s37
      %s159 = ssub.s32 %s26, %s33
      %s160 = sor.u32 %s158, %s159
      %p161 = scmp.eq.s32.totalorder %s160, 0
      %s163 = sadd.s32 %s162, 1
      %s164 = scalar_select %p161, %s162, %s163
      %p167 = pneg %p161
      %p168 = scmp.eq.s32.totalorder %s18, 1
      %p169 = por %p167, %p168
      %p170 = scmp.ne.s32.totalorder %s162, %s165
      %p171 = scmp.eq.s32.totalorder %s18, 0
      %p172 = por %p170, %p171
      %p173 = scmp.ne.s32.totalorder %s162, %s165
      %p174 = scmp.eq.s32.totalorder %s23, 1
      %p175 = por %p173, %p174
      %p176 = scmp.ne.s32.totalorder %s165, %s166
      %p177 = scmp.eq.s32.totalorder %s23, 0
      %p178 = por %p176, %p177
      %p179 = scmp.ne.s32.totalorder %s165, %s166
      %p180 = scmp.eq.s32.totalorder %s24, 1
      %p181 = por %p179, %p180
      %p183 = scmp.ne.s32.totalorder %s166, %s182
      %p184 = scmp.eq.s32.totalorder %s24, 0
      %p185 = por %p183, %p184
      %p186 = scmp.le.s32.totalorder 1, %s18
      %p187 = scmp.lt.s32.totalorder %s18, 3
      %p188 = pnand %p186, %p187
      %p189 = pneg %p188
      // Predicated region
      $region9: #{tpu_custom_call.1} parent=5 // pred_check
        _
      $region10: #{tpu_custom_call.1} parent=5 // pred_check_branch
        %191 = sbr.rel (%p188) target = $region12
      $region11: #{tpu_custom_call.1} parent=5 // pred_region
        %s192 = ssub.s32 %s18, 1
        // Predicated region
        $region13: #{tpu_custom_call.1} parent=11 // pred_check
          %p193 = pneg %p77
        $region14: #{tpu_custom_call.1} parent=11 // pred_check_branch
          %195 = sbr.rel (%p193) target = $region16
        $region15: #{tpu_custom_call.1} parent=11 // pred_region
          %s197 = ssub.s32 1024, 1024
          %198 = vsyncadd [#allocation7], %s197
          %s199 = sshll.u32 [#allocation6], 4
          %s200 = int_to_ptr.vmem [resolvable:$true] %s199
          %205 = dma.hbm_to_vmem [thread:$0]  %s1, 1024, %s200, [#allocation7], 64, 64, 4
        $region16: #{tpu_custom_call.1} parent=11 // pred_fallthru
          _
        // Predicated region
        $region17: #{tpu_custom_call.1} parent=11 // pred_check
          %p206 = pneg %p98
        $region18: #{tpu_custom_call.1} parent=11 // pred_check_branch
          %208 = sbr.rel (%p206) target = $region20
        $region19: #{tpu_custom_call.1} parent=11 // pred_region
          _
        $region20: #{tpu_custom_call.1} parent=11 // pred_fallthru
          _
        // Predicated region
        $region21: #{tpu_custom_call.1} parent=11 // pred_check
          %p209 = pneg %p124
        $region22: #{tpu_custom_call.1} parent=11 // pred_check_branch
          %211 = sbr.rel (%p209) target = $region24
        $region23: #{tpu_custom_call.1} parent=11 // pred_region
          %s213 = ssub.s32 1024, 1024
          %214 = vsyncadd [#allocation7], %s213
          %s215 = smul.addr %s28, 64
          %s216 = scalar_lea.hbm %s3, %s215
          %s217 = sshll.u32 [#allocation8], 4
          %s218 = int_to_ptr.vmem [resolvable:$true] %s217
          %223 = dma.hbm_to_vmem [thread:$0]  %s216, 1024, %s218, [#allocation7], 64, 64, 4
        $region24: #{tpu_custom_call.1} parent=11 // pred_fallthru
          _
        // Predicated region
        $region25: #{tpu_custom_call.1} parent=11 // pred_check
          %p224 = pneg %p150
        $region26: #{tpu_custom_call.1} parent=11 // pred_check_branch
          %226 = sbr.rel (%p224) target = $region28
        $region27: #{tpu_custom_call.1} parent=11 // pred_region
          %p227 = scmp.lt.s32.totalorder %s28, 0
          %s228 = scalar_select %p227, %s28, 0
          %s229 = scalar_lea.vmem %s4, %s228
        $region28: #{tpu_custom_call.1} parent=11 // pred_fallthru
          _
      $region12: #{tpu_custom_call.1} parent=5 // pred_fallthru
        _
      %p230 = scmp.lt.s32.totalorder %s18, 2
      // Predicated region
      $region29: #{tpu_custom_call.1} parent=5 // pred_check
        %p231 = pneg %p230
      $region30: #{tpu_custom_call.1} parent=5 // pred_check_branch
        %233 = sbr.rel (%p231) target = $region32
      $region31: #{tpu_custom_call.1} parent=5 // pred_region
        // Predicated region
        $region33: #{tpu_custom_call.1} parent=31 // pred_check
          %p234 = pneg %p50
        $region34: #{tpu_custom_call.1} parent=31 // pred_check_branch
          %236 = sbr.rel (%p234) target = $region36
        $region35: #{tpu_custom_call.1} parent=31 // pred_region
          %s237 = sand.u32 %s40, 1
          %s238 = scalar_lea.sflag [#allocation4], %s237
          %s239 = sand.u32 %s40, 1
          %s240 = smul.addr %s239, 128
          %s241 = scalar_lea.vmem [#allocation3], %s240
          %s242 = smul.u32 32, %s25
          %s244 = ssub.s32 2048, 2048
          %245 = vsyncadd %s238, %s244
          %s246 = smul.addr %s242, 64
          %s247 = scalar_lea.hbm %s0, %s246
          %s248 = sshll.u32 %s241, 4
          %s249 = int_to_ptr.vmem [resolvable:$true] %s248
          %254 = dma.hbm_to_vmem [thread:$0]  %s247, 2048, %s249, %s238, 64, 64, 4
        $region36: #{tpu_custom_call.1} parent=31 // pred_fallthru
          _
      $region32: #{tpu_custom_call.1} parent=5 // pred_fallthru
        _
      %p255 = scmp.le.s32.totalorder 1, %s18
      %p256 = scmp.lt.s32.totalorder %s18, 3
      %p257 = pnand %p255, %p256
      %p258 = pneg %p257
      // Predicated region
      $region37: #{tpu_custom_call.1} parent=5 // pred_check
        _
      $region38: #{tpu_custom_call.1} parent=5 // pred_check_branch
        %260 = sbr.rel (%p257) target = $region40
      $region39: #{tpu_custom_call.1} parent=5 // pred_region
        %s261 = ssub.s32 %s18, 1
        %s262 = sand.u32 %s43, 1
        %s263 = scalar_lea.sflag [#allocation4], %s262
        %s264 = sand.u32 %s43, 1
        %s265 = smul.addr %s264, 128
        %s266 = scalar_lea.vmem [#allocation3], %s265
        // Predicated region
        $region41: #{tpu_custom_call.1} parent=39 // pred_check
          %p267 = pneg %p56
        $region42: #{tpu_custom_call.1} parent=39 // pred_check_branch
          %269 = sbr.rel (%p267) target = $region44
        $region43: #{tpu_custom_call.1} parent=39 // pred_region
          %270 = dma.done %s263, 2048
        $region44: #{tpu_custom_call.1} parent=39 // pred_fallthru
          _
        // Predicated region
        $region45: #{tpu_custom_call.1} parent=39 // pred_check
          %p271 = pneg %p77
        $region46: #{tpu_custom_call.1} parent=39 // pred_check_branch
          %273 = sbr.rel (%p271) target = $region48
        $region47: #{tpu_custom_call.1} parent=39 // pred_region
          %274 = dma.done [#allocation7], 1024
        $region48: #{tpu_custom_call.1} parent=39 // pred_fallthru
          _
        // Predicated region
        $region49: #{tpu_custom_call.1} parent=39 // pred_check
          %p275 = pneg %p124
        $region50: #{tpu_custom_call.1} parent=39 // pred_check_branch
          %277 = sbr.rel (%p275) target = $region52
        $region51: #{tpu_custom_call.1} parent=39 // pred_region
          %278 = dma.done [#allocation7], 1024
        $region52: #{tpu_custom_call.1} parent=39 // pred_fallthru
          _
        %s279 = sand.u32 %s43, 1
        %s280 = scalar_lea.sflag [#allocation4], %s279
        %s281 = sand.u32 %s43, 1
        %s282 = smul.addr %s281, 128
        %s283 = scalar_lea.vmem [#allocation3], %s282
        %p284 = pneg %p56
        %p285 = pneg %p53
        %p286 = pneg %p77
        %p287 = pneg %p74
        %p288 = pneg %p98
        %p289 = pneg %p95
        %p290 = pneg %p124
        %p291 = pneg %p121
        %p292 = scmp.lt.s32.totalorder %s28, 0
        %s293 = scalar_select %p292, %s28, 0
        %s294 = scalar_lea.vmem %s4, %s293
        %p295 = pneg %p150
        %p296 = pneg %p147
        %p297 = pneg %p178
        %p298 = pneg %p175
        %s299 = sand.u32 %s165, 1
        %s300 = scalar_lea.sflag [#allocation5], %s299
        %s301 = sand.u32 %s165, 1
        %s302 = smul.addr %s301, 256
        %s303 = scalar_lea.vmem [#allocation9], %s302
        %s304 = smul.u32 32, %s27
        %p305 = scmp.lt.s32.totalorder %s28, 0
        %s306 = scalar_select %p305, %s28, 0
        %s307 = scalar_lea.vmem %s4, %s306
        %s308 = smul.u32 32, %s27
        %p310 = scmp.eq.s32.totalorder %s28, 0
        // Predicated region
        $region53: #{tpu_custom_call.1} parent=39 // pred_check
          %p311 = pneg %p310
        $region54: #{tpu_custom_call.1} parent=39 // pred_check_branch
          %313 = sbr.rel (%p311) target = $region56
        $region55: #{tpu_custom_call.1} parent=39 // pred_region
          %v314 = vld [vmem:[%s266] sm:$0xf]
          %v315 = vld [vmem:[%s266 + $0x4] sm:$0xf]
          %v316 = vld [vmem:[%s266 + $0x8] sm:$0xf]
          %v317 = vld [vmem:[%s266 + $0xc] sm:$0xf]
          %v318 = vld [vmem:[%s266 + $0x10] sm:$0xf]
          %v319 = vld [vmem:[%s266 + $0x14] sm:$0xf]
          %v320 = vld [vmem:[%s266 + $0x18] sm:$0xf]
          %v321 = vld [vmem:[%s266 + $0x1c] sm:$0xf]
          %v322 = vld [vmem:[%s266 + $0x20] sm:$0xf]
          %v323 = vld [vmem:[%s266 + $0x24] sm:$0xf]
          %v324 = vld [vmem:[%s266 + $0x28] sm:$0xf]
          %v325 = vld [vmem:[%s266 + $0x2c] sm:$0xf]
          %v326 = vld [vmem:[%s266 + $0x30] sm:$0xf]
          %v327 = vld [vmem:[%s266 + $0x34] sm:$0xf]
          %v328 = vld [vmem:[%s266 + $0x38] sm:$0xf]
          %v329 = vld [vmem:[%s266 + $0x3c] sm:$0xf]
          %v330 = vld [vmem:[%s266 + $0x40] sm:$0xf]
          %v331 = vld [vmem:[%s266 + $0x44] sm:$0xf]
          %v332 = vld [vmem:[%s266 + $0x48] sm:$0xf]
          %v333 = vld [vmem:[%s266 + $0x4c] sm:$0xf]
          %v334 = vld [vmem:[%s266 + $0x50] sm:$0xf]
          %v335 = vld [vmem:[%s266 + $0x54] sm:$0xf]
          %v336 = vld [vmem:[%s266 + $0x58] sm:$0xf]
          %v337 = vld [vmem:[%s266 + $0x5c] sm:$0xf]
          %v338 = vld [vmem:[%s266 + $0x60] sm:$0xf]
          %v339 = vld [vmem:[%s266 + $0x64] sm:$0xf]
          %v340 = vld [vmem:[%s266 + $0x68] sm:$0xf]
          %v341 = vld [vmem:[%s266 + $0x6c] sm:$0xf]
          %v342 = vld [vmem:[%s266 + $0x70] sm:$0xf]
          %v343 = vld [vmem:[%s266 + $0x74] sm:$0xf]
          %v344 = vld [vmem:[%s266 + $0x78] sm:$0xf]
          %v345 = vld [vmem:[%s266 + $0x7c] sm:$0xf]
          %v346 = vld [vmem:[#allocation6] sm:$0xf]
          %v347 = vld [vmem:[#allocation6 + $0x4] sm:$0xf]
          %v348 = vld [vmem:[#allocation6 + $0x8] sm:$0xf]
          %v349 = vld [vmem:[#allocation6 + $0xc] sm:$0xf]
          %v350 = vld [vmem:[#allocation6 + $0x10] sm:$0xf]
          %v351 = vld [vmem:[#allocation6 + $0x14] sm:$0xf]
          %v352 = vld [vmem:[#allocation6 + $0x18] sm:$0xf]
          %v353 = vld [vmem:[#allocation6 + $0x1c] sm:$0xf]
          %v354 = vld [vmem:[#allocation6 + $0x20] sm:$0xf]
          %v355 = vld [vmem:[#allocation6 + $0x24] sm:$0xf]
          %v356 = vld [vmem:[#allocation6 + $0x28] sm:$0xf]
          %v357 = vld [vmem:[#allocation6 + $0x2c] sm:$0xf]
          %v358 = vld [vmem:[#allocation6 + $0x30] sm:$0xf]
          %v359 = vld [vmem:[#allocation6 + $0x34] sm:$0xf]
          %v360 = vld [vmem:[#allocation6 + $0x38] sm:$0xf]
          %v361 = vld [vmem:[#allocation6 + $0x3c] sm:$0xf]
          %v362 = vld [vmem:[%s2] sm:$0x1]
          %v364 = vlaneseq
          %v365 = vshrl.u32 %v364, 7
          %v366 = vsub.s32 0, %v365
          %v367 = vrot.slane %v362, %v366
          %v401 = vunpack.c.l.b16 %v314
          %v402 = vunpack.c.l.b16 %v315
          %v403 = vunpack.c.l.b16 %v316
          %v404 = vunpack.c.l.b16 %v317
          %v405 = vunpack.c.l.b16 %v318
          %v406 = vunpack.c.l.b16 %v319
          %v407 = vunpack.c.l.b16 %v320
          %v408 = vunpack.c.l.b16 %v321
          %v409 = vunpack.c.l.b16 %v322
          %v410 = vunpack.c.l.b16 %v323
          %v411 = vunpack.c.l.b16 %v324
          %v412 = vunpack.c.l.b16 %v325
          %v413 = vunpack.c.l.b16 %v326
          %v414 = vunpack.c.l.b16 %v327
          %v415 = vunpack.c.l.b16 %v328
          %v416 = vunpack.c.l.b16 %v329
          %v417 = vunpack.c.l.b16 %v330
          %v418 = vunpack.c.l.b16 %v331
          %v419 = vunpack.c.l.b16 %v332
          %v420 = vunpack.c.l.b16 %v333
          %v421 = vunpack.c.l.b16 %v334
          %v422 = vunpack.c.l.b16 %v335
          %v423 = vunpack.c.l.b16 %v336
          %v424 = vunpack.c.l.b16 %v337
          %v425 = vunpack.c.l.b16 %v338
          %v426 = vunpack.c.l.b16 %v339
          %v427 = vunpack.c.l.b16 %v340
          %v428 = vunpack.c.l.b16 %v341
          %v429 = vunpack.c.l.b16 %v342
          %v430 = vunpack.c.l.b16 %v343
          %v431 = vunpack.c.l.b16 %v344
          %v432 = vunpack.c.l.b16 %v345
          %v433 = vpack.c.b16 %v402, %v401
          %v434 = vpack.c.b16 %v404, %v403
          %v435 = vpack.c.b16 %v406, %v405
          %v436 = vpack.c.b16 %v408, %v407
          %v437 = vpack.c.b16 %v410, %v409
          %v438 = vpack.c.b16 %v412, %v411
          %v439 = vpack.c.b16 %v414, %v413
          %v440 = vpack.c.b16 %v416, %v415
          %v441 = vpack.c.b16 %v418, %v417
          %v442 = vpack.c.b16 %v420, %v419
          %v443 = vpack.c.b16 %v422, %v421
          %v444 = vpack.c.b16 %v424, %v423
          %v445 = vpack.c.b16 %v426, %v425
          %v446 = vpack.c.b16 %v428, %v427
          %v447 = vpack.c.b16 %v430, %v429
          %v448 = vpack.c.b16 %v432, %v431
          %v481 = vunpack.c.l.b16 %v346
          %v482 = vunpack.c.l.b16 %v347
          %v483 = vunpack.c.l.b16 %v348
          %v484 = vunpack.c.l.b16 %v349
          %v485 = vunpack.c.l.b16 %v350
          %v486 = vunpack.c.l.b16 %v351
          %v487 = vunpack.c.l.b16 %v352
          %v488 = vunpack.c.l.b16 %v353
          %v489 = vunpack.c.l.b16 %v354
          %v490 = vunpack.c.l.b16 %v355
          %v491 = vunpack.c.l.b16 %v356
          %v492 = vunpack.c.l.b16 %v357
          %v493 = vunpack.c.l.b16 %v358
          %v494 = vunpack.c.l.b16 %v359
          %v495 = vunpack.c.l.b16 %v360
          %v496 = vunpack.c.l.b16 %v361
          %v497 = vpack.c.b16 %v482, %v481
          %v498 = vpack.c.b16 %v484, %v483
          %v499 = vpack.c.b16 %v486, %v485
          %v500 = vpack.c.b16 %v488, %v487
          %v501 = vpack.c.b16 %v490, %v489
          %v502 = vpack.c.b16 %v492, %v491
          %v503 = vpack.c.b16 %v494, %v493
          %v504 = vpack.c.b16 %v496, %v495
          %513 = vmatprep.subr.bf16.mxu0 0
          %514 = vmatpush1.bf16.msra.mxu0 %v497
          %515 = vmatprep.subr.bf16.mxu0 0
          %516 = vmatpush1.bf16.msra.mxu0 %v498
          %517 = vmatprep.subr.bf16.mxu0 0
          %518 = vmatpush1.bf16.msra.mxu0 %v499
          %519 = vmatprep.subr.bf16.mxu0 0
          %520 = vmatpush1.bf16.msra.mxu0 %v500
          %521 = vmatprep.subr.bf16.mxu0 0
          %522 = vmatpush1.bf16.msra.mxu0 %v501
          %523 = vmatprep.subr.bf16.mxu0 0
          %524 = vmatpush1.bf16.msra.mxu0 %v502
          %525 = vmatprep.subr.bf16.mxu0 0
          %526 = vmatpush1.bf16.msra.mxu0 %v503
          %527 = vmatprep.subr.bf16.mxu0 0
          %528 = vmatpush1.bf16.msra.mxu0 %v504
          %529 = vmatprep.subr.bf16.mxu0 0
          %530 = vmatpush1.bf16.msra.mxu0 0
          %531 = vmatprep.subr.bf16.mxu0 0
          %532 = vmatpush1.bf16.msra.mxu0 0
          %533 = vmatprep.subr.bf16.mxu0 0
          %534 = vmatpush1.bf16.msra.mxu0 0
          %535 = vmatprep.subr.bf16.mxu0 0
          %536 = vmatpush1.bf16.msra.mxu0 0
          %537 = vmatprep.subr.bf16.mxu0 0
          %538 = vmatpush1.bf16.msra.mxu0 0
          %539 = vmatprep.subr.bf16.mxu0 0
          %540 = vmatpush1.bf16.msra.mxu0 0
          %541 = vmatprep.subr.bf16.mxu0 0
          %542 = vmatpush1.bf16.msra.mxu0 0
          %543 = vmatprep.subr.bf16.mxu0 0
          %544 = vmatpush1.bf16.msra.mxu0 0
          %545 = vmatprep.mubr.bf16.mxu0 0
          %546 = vmatmul.mubr.bf16.gmra.mrb[0].mxu0 %v433
          %v547 = vpop.f32.mrb[0].mxu0
          %v548 = vadd.f32 %v367, %v547
          %v549 = vpop.f32.mrb[0].mxu0
          %v550 = vpop.f32.mrb[0].mxu0
          %v551 = vadd.f32 %v367, %v550
          %v552 = vpop.f32.mrb[0].mxu0
          %553 = vmatprep.mubr.bf16.mxu0 0
          %554 = vmatmul.mubr.bf16.gmra.mrb[0].mxu0 %v434
          %v555 = vpop.f32.mrb[0].mxu0
          %v556 = vadd.f32 %v367, %v555
          %v557 = vpop.f32.mrb[0].mxu0
          %v558 = vpop.f32.mrb[0].mxu0
          %v559 = vadd.f32 %v367, %v558
          %v560 = vpop.f32.mrb[0].mxu0
          %561 = vmatprep.mubr.bf16.mxu0 0
          %562 = vmatmul.mubr.bf16.gmra.mrb[0].mxu0 %v435
          %v563 = vpop.f32.mrb[0].mxu0
          %v564 = vadd.f32 %v367, %v563
          %v565 = vpop.f32.mrb[0].mxu0
          %v566 = vpop.f32.mrb[0].mxu0
          %v567 = vadd.f32 %v367, %v566
          %v568 = vpop.f32.mrb[0].mxu0
          %569 = vmatprep.mubr.bf16.mxu0 0
          %570 = vmatmul.mubr.bf16.gmra.mrb[0].mxu0 %v436
          %v571 = vpop.f32.mrb[0].mxu0
          %v572 = vadd.f32 %v367, %v571
          %v573 = vpop.f32.mrb[0].mxu0
          %v574 = vpop.f32.mrb[0].mxu0
          %v575 = vadd.f32 %v367, %v574
          %v576 = vpop.f32.mrb[0].mxu0
          %577 = vmatprep.mubr.bf16.mxu0 0
          %578 = vmatmul.mubr.bf16.gmra.mrb[0].mxu0 %v437
          %v579 = vpop.f32.mrb[0].mxu0
          %v580 = vadd.f32 %v367, %v579
          %v581 = vpop.f32.mrb[0].mxu0
          %v582 = vpop.f32.mrb[0].mxu0
          %v583 = vadd.f32 %v367, %v582
          %v584 = vpop.f32.mrb[0].mxu0
          %585 = vmatprep.mubr.bf16.mxu0 0
          %586 = vmatmul.mubr.bf16.gmra.mrb[0].mxu0 %v438
          %v587 = vpop.f32.mrb[0].mxu0
          %v588 = vadd.f32 %v367, %v587
          %v589 = vpop.f32.mrb[0].mxu0
          %v590 = vpop.f32.mrb[0].mxu0
          %v591 = vadd.f32 %v367, %v590
          %v592 = vpop.f32.mrb[0].mxu0
          %593 = vmatprep.mubr.bf16.mxu0 0
          %594 = vmatmul.mubr.bf16.gmra.mrb[0].mxu0 %v439
          %v595 = vpop.f32.mrb[0].mxu0
          %v596 = vadd.f32 %v367, %v595
          %v597 = vpop.f32.mrb[0].mxu0
          %v598 = vpop.f32.mrb[0].mxu0
          %v599 = vadd.f32 %v367, %v598
          %v600 = vpop.f32.mrb[0].mxu0
          %601 = vmatprep.mubr.bf16.mxu0 0
          %602 = vmatmul.mubr.bf16.gmra.mrb[0].mxu0 %v440
          %v603 = vpop.f32.mrb[0].mxu0
          %v604 = vadd.f32 %v367, %v603
          %v605 = vpop.f32.mrb[0].mxu0
          %v606 = vpop.f32.mrb[0].mxu0
          %v607 = vadd.f32 %v367, %v606
          %v608 = vpop.f32.mrb[0].mxu0
          %609 = vmatprep.mubr.bf16.mxu0 0
          %610 = vmatmul.mubr.bf16.gmra.mrb[0].mxu0 %v441
          %v611 = vpop.f32.mrb[0].mxu0
          %v612 = vadd.f32 %v367, %v611
          %v613 = vpop.f32.mrb[0].mxu0
          %v614 = vpop.f32.mrb[0].mxu0
          %v615 = vadd.f32 %v367, %v614
          %v616 = vpop.f32.mrb[0].mxu0
          %617 = vmatprep.mubr.bf16.mxu0 0
          %618 = vmatmul.mubr.bf16.gmra.mrb[0].mxu0 %v442
          %v619 = vpop.f32.mrb[0].mxu0
          %v620 = vadd.f32 %v367, %v619
          %v621 = vpop.f32.mrb[0].mxu0
          %v622 = vpop.f32.mrb[0].mxu0
          %v623 = vadd.f32 %v367, %v622
          %v624 = vpop.f32.mrb[0].mxu0
          %625 = vmatprep.mubr.bf16.mxu0 0
          %626 = vmatmul.mubr.bf16.gmra.mrb[0].mxu0 %v443
          %v627 = vpop.f32.mrb[0].mxu0
          %v628 = vadd.f32 %v367, %v627
          %v629 = vpop.f32.mrb[0].mxu0
          %v630 = vpop.f32.mrb[0].mxu0
          %v631 = vadd.f32 %v367, %v630
          %v632 = vpop.f32.mrb[0].mxu0
          %633 = vmatprep.mubr.bf16.mxu0 0
          %634 = vmatmul.mubr.bf16.gmra.mrb[0].mxu0 %v444
          %v635 = vpop.f32.mrb[0].mxu0
          %v636 = vadd.f32 %v367, %v635
          %v637 = vpop.f32.mrb[0].mxu0
          %v638 = vpop.f32.mrb[0].mxu0
          %v639 = vadd.f32 %v367, %v638
          %v640 = vpop.f32.mrb[0].mxu0
          %641 = vmatprep.mubr.bf16.mxu0 0
          %642 = vmatmul.mubr.bf16.gmra.mrb[0].mxu0 %v445
          %v643 = vpop.f32.mrb[0].mxu0
          %v644 = vadd.f32 %v367, %v643
          %v645 = vpop.f32.mrb[0].mxu0
          %v646 = vpop.f32.mrb[0].mxu0
          %v647 = vadd.f32 %v367, %v646
          %v648 = vpop.f32.mrb[0].mxu0
          %649 = vmatprep.mubr.bf16.mxu0 0
          %650 = vmatmul.mubr.bf16.gmra.mrb[0].mxu0 %v446
          %v651 = vpop.f32.mrb[0].mxu0
          %v652 = vadd.f32 %v367, %v651
          %v653 = vpop.f32.mrb[0].mxu0
          %v654 = vpop.f32.mrb[0].mxu0
          %v655 = vadd.f32 %v367, %v654
          %v656 = vpop.f32.mrb[0].mxu0
          %657 = vmatprep.mubr.bf16.mxu0 0
          %658 = vmatmul.mubr.bf16.gmra.mrb[0].mxu0 %v447
          %v659 = vpop.f32.mrb[0].mxu0
          %v660 = vadd.f32 %v367, %v659
          %v661 = vpop.f32.mrb[0].mxu0
          %v662 = vpop.f32.mrb[0].mxu0
          %v663 = vadd.f32 %v367, %v662
          %v664 = vpop.f32.mrb[0].mxu0
          %665 = vmatprep.mubr.bf16.mxu0 0
          %666 = vmatmul.mubr.bf16.gmra.mrb[0].mxu0 %v448
          %v667 = vpop.f32.mrb[0].mxu0
          %v668 = vadd.f32 %v367, %v667
          %v669 = vpop.f32.mrb[0].mxu0
          %v670 = vpop.f32.mrb[0].mxu0
          %v671 = vadd.f32 %v367, %v670
          %v672 = vpop.f32.mrb[0].mxu0
          %673 = vdwg.mxu0
          %v674 = vmax.f32 %v548, 0.0
          %v675 = vmax.f32 %v551, 0.0
          %v676 = vmax.f32 %v556, 0.0
          %v677 = vmax.f32 %v559, 0.0
          %v678 = vmax.f32 %v564, 0.0
          %v679 = vmax.f32 %v567, 0.0
          %v680 = vmax.f32 %v572, 0.0
          %v681 = vmax.f32 %v575, 0.0
          %v682 = vmax.f32 %v580, 0.0
          %v683 = vmax.f32 %v583, 0.0
          %v684 = vmax.f32 %v588, 0.0
          %v685 = vmax.f32 %v591, 0.0
          %v686 = vmax.f32 %v596, 0.0
          %v687 = vmax.f32 %v599, 0.0
          %v688 = vmax.f32 %v604, 0.0
          %v689 = vmax.f32 %v607, 0.0
          %v690 = vmax.f32 %v612, 0.0
          %v691 = vmax.f32 %v615, 0.0
          %v692 = vmax.f32 %v620, 0.0
          %v693 = vmax.f32 %v623, 0.0
          %v694 = vmax.f32 %v628, 0.0
          %v695 = vmax.f32 %v631, 0.0
          %v696 = vmax.f32 %v636, 0.0
          %v697 = vmax.f32 %v639, 0.0
          %v698 = vmax.f32 %v644, 0.0
          %v699 = vmax.f32 %v647, 0.0
          %v700 = vmax.f32 %v652, 0.0
          %v701 = vmax.f32 %v655, 0.0
          %v702 = vmax.f32 %v660, 0.0
          %v703 = vmax.f32 %v663, 0.0
          %v704 = vmax.f32 %v668, 0.0
          %v705 = vmax.f32 %v671, 0.0
          %v706 = vpack.c.bf16 %v675, %v674
          %v707 = vpack.c.bf16 %v677, %v676
          %v708 = vpack.c.bf16 %v679, %v678
          %v709 = vpack.c.bf16 %v681, %v680
          %v710 = vpack.c.bf16 %v683, %v682
          %v711 = vpack.c.bf16 %v685, %v684
          %v712 = vpack.c.bf16 %v687, %v686
          %v713 = vpack.c.bf16 %v689, %v688
          %v714 = vpack.c.bf16 %v691, %v690
          %v715 = vpack.c.bf16 %v693, %v692
          %v716 = vpack.c.bf16 %v695, %v694
          %v717 = vpack.c.bf16 %v697, %v696
          %v718 = vpack.c.bf16 %v699, %v698
          %v719 = vpack.c.bf16 %v701, %v700
          %v720 = vpack.c.bf16 %v703, %v702
          %v721 = vpack.c.bf16 %v705, %v704
          %722 = vst [vmem:[#allocation2] sm:$0xff] %v706
          %723 = vst [vmem:[#allocation2 + $0x8] sm:$0xff] %v707
          %724 = vst [vmem:[#allocation2 + $0x10] sm:$0xff] %v708
          %725 = vst [vmem:[#allocation2 + $0x18] sm:$0xff] %v709
          %726 = vst [vmem:[#allocation2 + $0x20] sm:$0xff] %v710
          %727 = vst [vmem:[#allocation2 + $0x28] sm:$0xff] %v711
          %728 = vst [vmem:[#allocation2 + $0x30] sm:$0xff] %v712
          %729 = vst [vmem:[#allocation2 + $0x38] sm:$0xff] %v713
          %730 = vst [vmem:[#allocation2 + $0x40] sm:$0xff] %v714
          %731 = vst [vmem:[#allocation2 + $0x48] sm:$0xff] %v715
          %732 = vst [vmem:[#allocation2 + $0x50] sm:$0xff] %v716
          %733 = vst [vmem:[#allocation2 + $0x58] sm:$0xff] %v717
          %734 = vst [vmem:[#allocation2 + $0x60] sm:$0xff] %v718
          %735 = vst [vmem:[#allocation2 + $0x68] sm:$0xff] %v719
          %736 = vst [vmem:[#allocation2 + $0x70] sm:$0xff] %v720
          %737 = vst [vmem:[#allocation2 + $0x78] sm:$0xff] %v721
        $region56: #{tpu_custom_call.1} parent=39 // pred_fallthru
          _
        %v738 = vld [vmem:[#allocation2] sm:$0xff]
        %v739 = vld [vmem:[#allocation2 + $0x8] sm:$0xff]
        %v740 = vld [vmem:[#allocation2 + $0x10] sm:$0xff]
        %v741 = vld [vmem:[#allocation2 + $0x18] sm:$0xff]
        %v742 = vld [vmem:[#allocation2 + $0x20] sm:$0xff]
        %v743 = vld [vmem:[#allocation2 + $0x28] sm:$0xff]
        %v744 = vld [vmem:[#allocation2 + $0x30] sm:$0xff]
        %v745 = vld [vmem:[#allocation2 + $0x38] sm:$0xff]
        %v746 = vld [vmem:[#allocation2 + $0x40] sm:$0xff]
        %v747 = vld [vmem:[#allocation2 + $0x48] sm:$0xff]
        %v748 = vld [vmem:[#allocation2 + $0x50] sm:$0xff]
        %v749 = vld [vmem:[#allocation2 + $0x58] sm:$0xff]
        %v750 = vld [vmem:[#allocation2 + $0x60] sm:$0xff]
        %v751 = vld [vmem:[#allocation2 + $0x68] sm:$0xff]
        %v752 = vld [vmem:[#allocation2 + $0x70] sm:$0xff]
        %v753 = vld [vmem:[#allocation2 + $0x78] sm:$0xff]
        %v754 = vld [vmem:[#allocation8] sm:$0xf]
        %v755 = vld [vmem:[#allocation8 + $0x4] sm:$0xf]
        %v756 = vld [vmem:[#allocation8 + $0x8] sm:$0xf]
        %v757 = vld [vmem:[#allocation8 + $0xc] sm:$0xf]
        %v758 = vld [vmem:[#allocation8 + $0x10] sm:$0xf]
        %v759 = vld [vmem:[#allocation8 + $0x14] sm:$0xf]
        %v760 = vld [vmem:[#allocation8 + $0x18] sm:$0xf]
        %v761 = vld [vmem:[#allocation8 + $0x1c] sm:$0xf]
        %v762 = vld [vmem:[#allocation8 + $0x20] sm:$0xf]
        %v763 = vld [vmem:[#allocation8 + $0x24] sm:$0xf]
        %v764 = vld [vmem:[#allocation8 + $0x28] sm:$0xf]
        %v765 = vld [vmem:[#allocation8 + $0x2c] sm:$0xf]
        %v766 = vld [vmem:[#allocation8 + $0x30] sm:$0xf]
        %v767 = vld [vmem:[#allocation8 + $0x34] sm:$0xf]
        %v768 = vld [vmem:[#allocation8 + $0x38] sm:$0xf]
        %v769 = vld [vmem:[#allocation8 + $0x3c] sm:$0xf]
        %v770 = vld [vmem:[%s307] sm:$0x1]
        %v772 = vlaneseq
        %v773 = vshrl.u32 %v772, 7
        %v774 = vsub.s32 0, %v773
        %v775 = vrot.slane %v770, %v774
        %v793 = vunpack.c.l.b16 %v754
        %v794 = vunpack.c.l.b16 %v755
        %v795 = vunpack.c.l.b16 %v756
        %v796 = vunpack.c.l.b16 %v757
        %v797 = vunpack.c.l.b16 %v758
        %v798 = vunpack.c.l.b16 %v759
        %v799 = vunpack.c.l.b16 %v760
        %v800 = vunpack.c.l.b16 %v761
        %v801 = vunpack.c.l.b16 %v762
        %v802 = vunpack.c.l.b16 %v763
        %v803 = vunpack.c.l.b16 %v764
        %v804 = vunpack.c.l.b16 %v765
        %v805 = vunpack.c.l.b16 %v766
        %v806 = vunpack.c.l.b16 %v767
        %v807 = vunpack.c.l.b16 %v768
        %v808 = vunpack.c.l.b16 %v769
        %v809 = vpack.c.b16 %v794, %v793
        %v810 = vpack.c.b16 %v796, %v795
        %v811 = vpack.c.b16 %v798, %v797
        %v812 = vpack.c.b16 %v800, %v799
        %v813 = vpack.c.b16 %v802, %v801
        %v814 = vpack.c.b16 %v804, %v803
        %v815 = vpack.c.b16 %v806, %v805
        %v816 = vpack.c.b16 %v808, %v807
        %825 = vmatprep.subr.bf16.mxu0 0
        %826 = vmatpush1.bf16.msra.mxu0 %v809
        %827 = vmatprep.subr.bf16.mxu0 0
        %828 = vmatpush1.bf16.msra.mxu0 %v810
        %829 = vmatprep.subr.bf16.mxu0 0
        %830 = vmatpush1.bf16.msra.mxu0 %v811
        %831 = vmatprep.subr.bf16.mxu0 0
        %832 = vmatpush1.bf16.msra.mxu0 %v812
        %833 = vmatprep.subr.bf16.mxu0 0
        %834 = vmatpush1.bf16.msra.mxu0 %v813
        %835 = vmatprep.subr.bf16.mxu0 0
        %836 = vmatpush1.bf16.msra.mxu0 %v814
        %837 = vmatprep.subr.bf16.mxu0 0
        %838 = vmatpush1.bf16.msra.mxu0 %v815
        %839 = vmatprep.subr.bf16.mxu0 0
        %840 = vmatpush1.bf16.msra.mxu0 %v816
        %841 = vmatprep.subr.bf16.mxu0 0
        %842 = vmatpush1.bf16.msra.mxu0 0
        %843 = vmatprep.subr.bf16.mxu0 0
        %844 = vmatpush1.bf16.msra.mxu0 0
        %845 = vmatprep.subr.bf16.mxu0 0
        %846 = vmatpush1.bf16.msra.mxu0 0
        %847 = vmatprep.subr.bf16.mxu0 0
        %848 = vmatpush1.bf16.msra.mxu0 0
        %849 = vmatprep.subr.bf16.mxu0 0
        %850 = vmatpush1.bf16.msra.mxu0 0
        %851 = vmatprep.subr.bf16.mxu0 0
        %852 = vmatpush1.bf16.msra.mxu0 0
        %853 = vmatprep.subr.bf16.mxu0 0
        %854 = vmatpush1.bf16.msra.mxu0 0
        %855 = vmatprep.subr.bf16.mxu0 0
        %856 = vmatpush1.bf16.msra.mxu0 0
        %857 = vmatprep.mubr.bf16.mxu0 0
        %858 = vmatmul.mubr.bf16.gmra.mrb[0].mxu0 %v738
        %v859 = vpop.f32.mrb[0].mxu0
        %v860 = vadd.f32 %v775, %v859
        %v861 = vpop.f32.mrb[0].mxu0
        %v862 = vpop.f32.mrb[0].mxu0
        %v863 = vadd.f32 %v775, %v862
        %v864 = vpop.f32.mrb[0].mxu0
        %865 = vmatprep.mubr.bf16.mxu0 0
        %866 = vmatmul.mubr.bf16.gmra.mrb[0].mxu0 %v739
        %v867 = vpop.f32.mrb[0].mxu0
        %v868 = vadd.f32 %v775, %v867
        %v869 = vpop.f32.mrb[0].mxu0
        %v870 = vpop.f32.mrb[0].mxu0
        %v871 = vadd.f32 %v775, %v870
        %v872 = vpop.f32.mrb[0].mxu0
        %873 = vmatprep.mubr.bf16.mxu0 0
        %874 = vmatmul.mubr.bf16.gmra.mrb[0].mxu0 %v740
        %v875 = vpop.f32.mrb[0].mxu0
        %v876 = vadd.f32 %v775, %v875
        %v877 = vpop.f32.mrb[0].mxu0
        %v878 = vpop.f32.mrb[0].mxu0
        %v879 = vadd.f32 %v775, %v878
        %v880 = vpop.f32.mrb[0].mxu0
        %881 = vmatprep.mubr.bf16.mxu0 0
        %882 = vmatmul.mubr.bf16.gmra.mrb[0].mxu0 %v741
        %v883 = vpop.f32.mrb[0].mxu0
        %v884 = vadd.f32 %v775, %v883
        %v885 = vpop.f32.mrb[0].mxu0
        %v886 = vpop.f32.mrb[0].mxu0
        %v887 = vadd.f32 %v775, %v886
        %v888 = vpop.f32.mrb[0].mxu0
        %889 = vmatprep.mubr.bf16.mxu0 0
        %890 = vmatmul.mubr.bf16.gmra.mrb[0].mxu0 %v742
        %v891 = vpop.f32.mrb[0].mxu0
        %v892 = vadd.f32 %v775, %v891
        %v893 = vpop.f32.mrb[0].mxu0
        %v894 = vpop.f32.mrb[0].mxu0
        %v895 = vadd.f32 %v775, %v894
        %v896 = vpop.f32.mrb[0].mxu0
        %897 = vmatprep.mubr.bf16.mxu0 0
        %898 = vmatmul.mubr.bf16.gmra.mrb[0].mxu0 %v743
        %v899 = vpop.f32.mrb[0].mxu0
        %v900 = vadd.f32 %v775, %v899
        %v901 = vpop.f32.mrb[0].mxu0
        %v902 = vpop.f32.mrb[0].mxu0
        %v903 = vadd.f32 %v775, %v902
        %v904 = vpop.f32.mrb[0].mxu0
        %905 = vmatprep.mubr.bf16.mxu0 0
        %906 = vmatmul.mubr.bf16.gmra.mrb[0].mxu0 %v744
        %v907 = vpop.f32.mrb[0].mxu0
        %v908 = vadd.f32 %v775, %v907
        %v909 = vpop.f32.mrb[0].mxu0
        %v910 = vpop.f32.mrb[0].mxu0
        %v911 = vadd.f32 %v775, %v910
        %v912 = vpop.f32.mrb[0].mxu0
        %913 = vmatprep.mubr.bf16.mxu0 0
        %914 = vmatmul.mubr.bf16.gmra.mrb[0].mxu0 %v745
        %v915 = vpop.f32.mrb[0].mxu0
        %v916 = vadd.f32 %v775, %v915
        %v917 = vpop.f32.mrb[0].mxu0
        %v918 = vpop.f32.mrb[0].mxu0
        %v919 = vadd.f32 %v775, %v918
        %v920 = vpop.f32.mrb[0].mxu0
        %921 = vmatprep.mubr.bf16.mxu0 0
        %922 = vmatmul.mubr.bf16.gmra.mrb[0].mxu0 %v746
        %v923 = vpop.f32.mrb[0].mxu0
        %v924 = vadd.f32 %v775, %v923
        %v925 = vpop.f32.mrb[0].mxu0
        %v926 = vpop.f32.mrb[0].mxu0
        %v927 = vadd.f32 %v775, %v926
        %v928 = vpop.f32.mrb[0].mxu0
        %929 = vmatprep.mubr.bf16.mxu0 0
        %930 = vmatmul.mubr.bf16.gmra.mrb[0].mxu0 %v747
        %v931 = vpop.f32.mrb[0].mxu0
        %v932 = vadd.f32 %v775, %v931
        %v933 = vpop.f32.mrb[0].mxu0
        %v934 = vpop.f32.mrb[0].mxu0
        %v935 = vadd.f32 %v775, %v934
        %v936 = vpop.f32.mrb[0].mxu0
        %937 = vmatprep.mubr.bf16.mxu0 0
        %938 = vmatmul.mubr.bf16.gmra.mrb[0].mxu0 %v748
        %v939 = vpop.f32.mrb[0].mxu0
        %v940 = vadd.f32 %v775, %v939
        %v941 = vpop.f32.mrb[0].mxu0
        %v942 = vpop.f32.mrb[0].mxu0
        %v943 = vadd.f32 %v775, %v942
        %v944 = vpop.f32.mrb[0].mxu0
        %945 = vmatprep.mubr.bf16.mxu0 0
        %946 = vmatmul.mubr.bf16.gmra.mrb[0].mxu0 %v749
        %v947 = vpop.f32.mrb[0].mxu0
        %v948 = vadd.f32 %v775, %v947
        %v949 = vpop.f32.mrb[0].mxu0
        %v950 = vpop.f32.mrb[0].mxu0
        %v951 = vadd.f32 %v775, %v950
        %v952 = vpop.f32.mrb[0].mxu0
        %953 = vmatprep.mubr.bf16.mxu0 0
        %954 = vmatmul.mubr.bf16.gmra.mrb[0].mxu0 %v750
        %v955 = vpop.f32.mrb[0].mxu0
        %v956 = vadd.f32 %v775, %v955
        %v957 = vpop.f32.mrb[0].mxu0
        %v958 = vpop.f32.mrb[0].mxu0
        %v959 = vadd.f32 %v775, %v958
        %v960 = vpop.f32.mrb[0].mxu0
        %961 = vmatprep.mubr.bf16.mxu0 0
        %962 = vmatmul.mubr.bf16.gmra.mrb[0].mxu0 %v751
        %v963 = vpop.f32.mrb[0].mxu0
        %v964 = vadd.f32 %v775, %v963
        %v965 = vpop.f32.mrb[0].mxu0
        %v966 = vpop.f32.mrb[0].mxu0
        %v967 = vadd.f32 %v775, %v966
        %v968 = vpop.f32.mrb[0].mxu0
        %969 = vmatprep.mubr.bf16.mxu0 0
        %970 = vmatmul.mubr.bf16.gmra.mrb[0].mxu0 %v752
        %v971 = vpop.f32.mrb[0].mxu0
        %v972 = vadd.f32 %v775, %v971
        %v973 = vpop.f32.mrb[0].mxu0
        %v974 = vpop.f32.mrb[0].mxu0
        %v975 = vadd.f32 %v775, %v974
        %v976 = vpop.f32.mrb[0].mxu0
        %977 = vmatprep.mubr.bf16.mxu0 0
        %978 = vmatmul.mubr.bf16.gmra.mrb[0].mxu0 %v753
        %v979 = vpop.f32.mrb[0].mxu0
        %v980 = vadd.f32 %v775, %v979
        %v981 = vpop.f32.mrb[0].mxu0
        %v982 = vpop.f32.mrb[0].mxu0
        %v983 = vadd.f32 %v775, %v982
        %v984 = vpop.f32.mrb[0].mxu0
        %985 = vdwg.mxu0
        %v986 = vmax.f32 %v860, 0.0
        %v987 = vmax.f32 %v863, 0.0
        %v988 = vmax.f32 %v868, 0.0
        %v989 = vmax.f32 %v871, 0.0
        %v990 = vmax.f32 %v876, 0.0
        %v991 = vmax.f32 %v879, 0.0
        %v992 = vmax.f32 %v884, 0.0
        %v993 = vmax.f32 %v887, 0.0
        %v994 = vmax.f32 %v892, 0.0
        %v995 = vmax.f32 %v895, 0.0
        %v996 = vmax.f32 %v900, 0.0
        %v997 = vmax.f32 %v903, 0.0
        %v998 = vmax.f32 %v908, 0.0
        %v999 = vmax.f32 %v911, 0.0
        %v1000 = vmax.f32 %v916, 0.0
        %v1001 = vmax.f32 %v919, 0.0
        %v1002 = vmax.f32 %v924, 0.0
        %v1003 = vmax.f32 %v927, 0.0
        %v1004 = vmax.f32 %v932, 0.0
        %v1005 = vmax.f32 %v935, 0.0
        %v1006 = vmax.f32 %v940, 0.0
        %v1007 = vmax.f32 %v943, 0.0
        %v1008 = vmax.f32 %v948, 0.0
        %v1009 = vmax.f32 %v951, 0.0
        %v1010 = vmax.f32 %v956, 0.0
        %v1011 = vmax.f32 %v959, 0.0
        %v1012 = vmax.f32 %v964, 0.0
        %v1013 = vmax.f32 %v967, 0.0
        %v1014 = vmax.f32 %v972, 0.0
        %v1015 = vmax.f32 %v975, 0.0
        %v1016 = vmax.f32 %v980, 0.0
        %v1017 = vmax.f32 %v983, 0.0
        %1018 = vst [vmem:[%s303] sm:$0xff] %v986
        %1019 = vst [vmem:[%s303 + $0x8] sm:$0xff] %v987
        %1020 = vst [vmem:[%s303 + $0x10] sm:$0xff] %v988
        %1021 = vst [vmem:[%s303 + $0x18] sm:$0xff] %v989
        %1022 = vst [vmem:[%s303 + $0x20] sm:$0xff] %v990
        %1023 = vst [vmem:[%s303 + $0x28] sm:$0xff] %v991
        %1024 = vst [vmem:[%s303 + $0x30] sm:$0xff] %v992
        %1025 = vst [vmem:[%s303 + $0x38] sm:$0xff] %v993
        %1026 = vst [vmem:[%s303 + $0x40] sm:$0xff] %v994
        %1027 = vst [vmem:[%s303 + $0x48] sm:$0xff] %v995
        %1028 = vst [vmem:[%s303 + $0x50] sm:$0xff] %v996
        %1029 = vst [vmem:[%s303 + $0x58] sm:$0xff] %v997
        %1030 = vst [vmem:[%s303 + $0x60] sm:$0xff] %v998
        %1031 = vst [vmem:[%s303 + $0x68] sm:$0xff] %v999
        %1032 = vst [vmem:[%s303 + $0x70] sm:$0xff] %v1000
        %1033 = vst [vmem:[%s303 + $0x78] sm:$0xff] %v1001
        %1034 = vst [vmem:[%s303 + $0x80] sm:$0xff] %v1002
        %1035 = vst [vmem:[%s303 + $0x88] sm:$0xff] %v1003
        %1036 = vst [vmem:[%s303 + $0x90] sm:$0xff] %v1004
        %1037 = vst [vmem:[%s303 + $0x98] sm:$0xff] %v1005
        %1038 = vst [vmem:[%s303 + $0xa0] sm:$0xff] %v1006
        %1039 = vst [vmem:[%s303 + $0xa8] sm:$0xff] %v1007
        %1040 = vst [vmem:[%s303 + $0xb0] sm:$0xff] %v1008
        %1041 = vst [vmem:[%s303 + $0xb8] sm:$0xff] %v1009
        %1042 = vst [vmem:[%s303 + $0xc0] sm:$0xff] %v1010
        %1043 = vst [vmem:[%s303 + $0xc8] sm:$0xff] %v1011
        %1044 = vst [vmem:[%s303 + $0xd0] sm:$0xff] %v1012
        %1045 = vst [vmem:[%s303 + $0xd8] sm:$0xff] %v1013
        %1046 = vst [vmem:[%s303 + $0xe0] sm:$0xff] %v1014
        %1047 = vst [vmem:[%s303 + $0xe8] sm:$0xff] %v1015
        %1048 = vst [vmem:[%s303 + $0xf0] sm:$0xff] %v1016
        %1049 = vst [vmem:[%s303 + $0xf8] sm:$0xff] %v1017
        %s1050 = sand.u32 %s165, 1
        %s1051 = scalar_lea.sflag [#allocation5], %s1050
        %s1052 = sand.u32 %s165, 1
        %s1053 = smul.addr %s1052, 256
        %s1054 = scalar_lea.vmem [#allocation9], %s1053
        // Predicated region
        $region57: #{tpu_custom_call.1} parent=39 // pred_check
          %p1055 = pneg %p175
        $region58: #{tpu_custom_call.1} parent=39 // pred_check_branch
          %1057 = sbr.rel (%p1055) target = $region60
        $region59: #{tpu_custom_call.1} parent=39 // pred_region
          %s1058 = smul.u32 32, %s27
          %s1060 = ssub.s32 4096, 4096
          %1061 = vsyncadd %s1051, %s1060
          %s1062 = sadd.s32 %s28, %s1058
          %s1063 = smul.addr %s1062, 128
          %s1064 = scalar_lea.hbm %s5, %s1063
          %s1065 = sshll.u32 %s1054, 4
          %s1066 = int_to_ptr.vmem [resolvable:$true] %s1065
          %1071 = dma.vmem_to_hbm [thread:$0]  %s1066, 4096, %s1064, %s1051, 128, 128, 8
        $region60: #{tpu_custom_call.1} parent=39 // pred_fallthru
          _
      $region40: #{tpu_custom_call.1} parent=5 // pred_fallthru
        _
      %p1072 = scmp.le.s32.totalorder 2, %s18
      // Predicated region
      $region61: #{tpu_custom_call.1} parent=5 // pred_check
        %p1073 = pneg %p1072
      $region62: #{tpu_custom_call.1} parent=5 // pred_check_branch
        %1075 = sbr.rel (%p1073) target = $region64
      $region63: #{tpu_custom_call.1} parent=5 // pred_region
        %s1076 = ssub.s32 %s18, 2
        // Predicated region
        $region65: #{tpu_custom_call.1} parent=63 // pred_check
          %p1077 = pneg %p181
        $region66: #{tpu_custom_call.1} parent=63 // pred_check_branch
          %1079 = sbr.rel (%p1077) target = $region68
        $region67: #{tpu_custom_call.1} parent=63 // pred_region
          %s1080 = sand.u32 %s166, 1
          %s1081 = scalar_lea.sflag [#allocation5], %s1080
          %s1082 = sand.u32 %s166, 1
          %s1083 = smul.addr %s1082, 256
          %s1084 = scalar_lea.vmem [#allocation9], %s1083
          %1085 = dma.done %s1081, 4096
        $region68: #{tpu_custom_call.1} parent=63 // pred_fallthru
          _
      $region64: #{tpu_custom_call.1} parent=5 // pred_fallthru
        _
    $region6: #{tpu_custom_call.1} parent=1 // loop_footer
      %s22 = sadd.s32 1, %s18
    $region7: #{tpu_custom_call.1} parent=1 // loop_footer_branch
      %17 = sbr.rel target = $region3
    $region8: #{tpu_custom_call.1} parent=1 // loop_exit
      _
    %1086 = vsyncpa [#allocation4], 1
    %s1087 = scalar_lea.sflag [#allocation4], 1
    %1088 = vsyncpa %s1087, 1
    %1089 = vsyncpa [#allocation7], 1
    %1090 = vsyncpa [#allocation5], 1
    %s1091 = scalar_lea.sflag [#allocation5], 1
    %1092 = vsyncpa %s1091, 1

</llo_original>
